<compile_context>
chip_gen: v6e
topology: v6e:2x2x1
jax: 0.10.0
libtpu: 0.0.40
codegen_flags: <defaults>
</compile_context>

<pallas_src>
import jax
import jax.numpy as jnp
from jax.experimental import pallas as pl
from jax.experimental.pallas import tpu as pltpu


def _round_up(x, m):
    return (x + m - 1) // m * m


def _make_stacked_kernel(activations):
    """Kernel chaining all layers on one (TM, K0) row-tile of x."""
    n_layers = len(activations)

    def kernel(x_ref, *refs):
        # refs = (w0, b0, w1, b1, ..., o_ref)
        o_ref = refs[2 * n_layers]
        h = x_ref[...]                                   # f32 (TM, K0)
        for li, act in enumerate(activations):
            w = refs[2 * li][...]                        # bf16 (K_pad, N_pad), VMEM-resident
            b = refs[2 * li + 1][...]                    # f32  (1, N_pad)
            # bf16 MXU inputs, f32 accumulation; bias/activation math in f32.
            h = jnp.dot(h.astype(jnp.bfloat16), w,
                        preferred_element_type=jnp.float32) + b
            if act == "tanh":
                h = jnp.tanh(h)
            elif act == "relu":
                h = jnp.maximum(h, 0.0)
            elif act == "sigmoid":
                # single EUP op instead of exp + reciprocal
                h = 0.5 * (jnp.tanh(0.5 * h) + 1.0)
            # None -> identity
        # Last layer may be lane-padded; store only the real columns directly
        # to an un-padded output block (no wrapper-side slice / extra HBM pass).
        o_ref[...] = h[:, :o_ref.shape[-1]].astype(o_ref.dtype)

    return kernel


def _choose_tile_m(M, K0, padded_widths, out_dim, weight_bytes):
    """Row tile from an explicit VMEM budget; multiple of 16 (bf16 packing)."""
    VMEM_BUDGET = 24 * (1 << 20)          # conservative: fits v7x 32 MiB scoped
    max_w = max(padded_widths)
    # double-buffered f32 x tile + double-buffered f32 out tile + rough
    # allowance for live f32/bf16 intermediates of the widest layer.
    per_row = 2 * K0 * 4 + 2 * out_dim * 4 + 3 * max_w * 4
    tm = (VMEM_BUDGET - weight_bytes) // max(per_row, 1)
    tm = max(16, min(2048, (tm // 16) * 16))
    tm = min(tm, _round_up(max(M, 1), 16))
    if M >= 32:
        # v7x: 2 TensorCores share the "parallel" grid axis -> guarantee >= 2
        # grid steps so neither core idles (no effect on v5e/v6e).
        tm = min(tm, _round_up(pl.cdiv(M, 2), 16))
    return int(max(16, _round_up(tm, 16))), per_row


def stacked_dense_forward(x2d, weights, biases, activations, out_dim):
    """Fused forward for the whole stack.

    x2d:      (M, K0) float32
    weights:  list of (K_pad_i, N_pad_i) bfloat16, pre-transposed + zero-padded
    biases:   list of (1, N_pad_i) float32, zero-padded
    out_dim:  real (unpadded) output width of the last layer
    """
    M, K0 = x2d.shape
    padded_widths = [w.shape[1] for w in weights]
    weight_bytes = sum(int(w.size) * 2 for w in weights) + sum(int(b.size) * 4 for b in biases)

    TM, per_row = _choose_tile_m(M, K0, padded_widths, out_dim, weight_bytes)
    grid_m = pl.cdiv(M, TM)

    kernel = _make_stacked_kernel(tuple(activations))

    in_specs = [pl.BlockSpec((TM, K0), lambda i: (i, 0))]
    flat_params = []
    for w, b in zip(weights, biases):
        kp, np_ = w.shape
        # Constant index_map -> block stays resident in VMEM across the grid;
        # single-buffered since it is never re-fetched.
        in_specs.append(pl.BlockSpec((kp, np_), lambda i: (0, 0),
                                     pipeline_mode=pl.Buffered(1)))
        in_specs.append(pl.BlockSpec((1, np_), lambda i: (0, 0),
                                     pipeline_mode=pl.Buffered(1)))
        flat_params.extend((w, b))

    flops = sum(2 * M * w.shape[0] * w.shape[1] for w in weights)
    transcendentals = sum(
        M * w.shape[1]
        for w, a in zip(weights, activations)
        if a in ("tanh", "sigmoid")
    )
    bytes_accessed = (
        M * K0 * 4
        + sum(int(w.size) * 2 for w in weights)
        + sum(int(b.size) * 4 for b in biases)
        + M * out_dim * 4
    )

    vmem_est = weight_bytes + TM * per_row
    vmem_limit = int(min(64 * (1 << 20), max(32 * (1 << 20), 2 * vmem_est)))

    out = pl.pallas_call(
        kernel,
        out_shape=jax.ShapeDtypeStruct((M, out_dim), x2d.dtype),
        grid=(grid_m,),
        in_specs=in_specs,
        # Un-padded output block: last dim equals the full array dim, so it is
        # a legal block; avoids the padded-write + XLA-slice extra HBM pass.
        out_specs=pl.BlockSpec((TM, out_dim), lambda i: (i, 0)),
        compiler_params=pltpu.CompilerParams(
            dimension_semantics=("parallel",),
            vmem_limit_bytes=vmem_limit,
        ),
        cost_estimate=pl.CostEstimate(
            flops=flops,
            transcendentals=transcendentals,
            bytes_accessed=bytes_accessed,
        ),
    )(x2d, *flat_params)

    return out


class StackedDensePallas:
    """JAX/Pallas equivalent of cuff-kt StackedDense (fused forward)."""

    def __init__(self, in_dimension, units, activation_fns, key):
        # activation_fns: list of None / "tanh" / "relu" / "sigmoid"
        dims = [in_dimension] + list(units)
        self.activations = list(activation_fns)
        self.out_dim = dims[-1]

        self.params_raw = []   # PyTorch-layout (out_dim, in_dim) w (f32), (out_dim,) b
        self.weights_p = []    # kernel layout: (K_pad, N_pad) bf16, pre-transposed + padded
        self.biases_p = []     # kernel layout: (1, N_pad) f32, padded

        k_in = in_dimension    # first layer consumes the raw (unpadded) feature dim
        for i in range(1, len(dims)):
            key, kw = jax.random.split(key)
            fan_in, fan_out = dims[i - 1], dims[i]
            # deterministic default init (glorot-style weight, zero bias)
            limit = (6.0 / (fan_in + fan_out)) ** 0.5
            w = jax.random.uniform(
                kw, (fan_out, fan_in), minval=-limit, maxval=limit,
                dtype=jnp.float32)
            b = jnp.zeros((fan_out,), dtype=jnp.float32)
            self.params_raw.append((w, b))

            # Pre-transpose once to (K, N), zero-pad N to a multiple of 128,
            # and store bf16 for native MXU rate + half the resident VMEM.
            n_pad = _round_up(fan_out, 128)
            w_kn = jnp.zeros((k_in, n_pad), dtype=jnp.bfloat16)
            w_kn = w_kn.at[:fan_in, :fan_out].set(w.T.astype(jnp.bfloat16))
            b_p = jnp.zeros((1, n_pad), dtype=jnp.float32)
            b_p = b_p.at[:, :fan_out].set(b)
            self.weights_p.append(w_kn)
            self.biases_p.append(b_p)

            # Next layer's K equals this layer's padded output width; its padded
            # K rows are zero, so padded activation columns contribute nothing.
            k_in = n_pad

    def __call__(self, x):
        lead_shape = x.shape[:-1]
        x2d = x.reshape(-1, x.shape[-1])
        y = stacked_dense_forward(
            x2d, self.weights_p, self.biases_p, self.activations, self.out_dim)
        return y.reshape(*lead_shape, self.out_dim)


if __name__ == "__main__":
    key = jax.random.PRNGKey(0)
    k_x, k_p = jax.random.split(key)

    batch, seq, hidden = 2, 8, 32
    x = jax.random.normal(k_x, (batch, seq, hidden), dtype=jnp.float32)

    # Matches typical usage: StackedDense(hidden, [64, hidden], [nn.Tanh, None])
    model = StackedDensePallas(hidden, [64, hidden], ["tanh", None], k_p)

    out = model(x)
    out = jax.block_until_ready(out)

    # Reference in plain JAX, matching the kernel's arithmetic: bf16-rounded
    # MXU inputs, f32 accumulation, f32 bias/activation.
    def _rnd_bf16(a):
        return a.astype(jnp.bfloat16).astype(jnp.float32)

    (w0, b0), (w1, b1) = model.params_raw
    h = x.reshape(-1, hidden)
    h = jnp.tanh(_rnd_bf16(h) @ _rnd_bf16(w0.T) + b0)
    h = _rnd_bf16(h) @ _rnd_bf16(w1.T) + b1
    ref = h.reshape(batch, seq, hidden)

    assert out.shape == (batch, seq, hidden)
    assert jnp.allclose(out, ref, atol=2e-3, rtol=2e-3)

    print("KERNEL_OK")
</pallas_src>

<mosaic_0001>
module attributes {stable_mosaic.version = 11 : i64} {
  func.func @kernel(%arg0: i32, %arg1: memref<16x32xf32, #tpu.memory_space<vmem>>, %arg2: memref<32x128xbf16, #tpu.memory_space<vmem>>, %arg3: memref<1x128xf32, #tpu.memory_space<vmem>>, %arg4: memref<128x128xbf16, #tpu.memory_space<vmem>>, %arg5: memref<1x128xf32, #tpu.memory_space<vmem>>, %arg6: memref<16x32xf32, #tpu.memory_space<vmem>>) attributes {dimension_semantics = [#tpu.dimension_semantics<parallel>], iteration_bounds = array<i64: 1>, scalar_prefetch = 0 : i64, scratch_operands = 0 : i64, tpu.core_type = #tpu.core_type<tc>, window_params = [{transform_indices = @transform_0, window_bounds = array<i64: 16, 32>}, {pipeline_mode = #tpu.pipeline_mode<synchronous>, transform_indices = @transform_1, window_bounds = array<i64: 32, 128>}, {pipeline_mode = #tpu.pipeline_mode<synchronous>, transform_indices = @transform_2, window_bounds = array<i64: 1, 128>}, {pipeline_mode = #tpu.pipeline_mode<synchronous>, transform_indices = @transform_3, window_bounds = array<i64: 128, 128>}, {pipeline_mode = #tpu.pipeline_mode<synchronous>, transform_indices = @transform_4, window_bounds = array<i64: 1, 128>}, {transform_indices = @transform_5, window_bounds = array<i64: 16, 32>}]} {
    %c0 = arith.constant 0 : index
    %c0_0 = arith.constant 0 : index
    %0 = vector.load %arg1[%c0, %c0_0] : memref<16x32xf32, #tpu.memory_space<vmem>>, vector<16x32xf32>
    %c0_1 = arith.constant 0 : index
    %c0_2 = arith.constant 0 : index
    %1 = vector.load %arg2[%c0_1, %c0_2] : memref<32x128xbf16, #tpu.memory_space<vmem>>, vector<32x128xbf16>
    %c0_3 = arith.constant 0 : index
    %c0_4 = arith.constant 0 : index
    %2 = vector.load %arg3[%c0_3, %c0_4] : memref<1x128xf32, #tpu.memory_space<vmem>>, vector<1x128xf32>
    %3 = arith.truncf %0 : vector<16x32xf32> to vector<16x32xbf16>
    %cst = arith.constant dense<0.000000e+00> : vector<16x128xf32>
    %4 = tpu.matmul %3, %1, %cst {dimension_numbers = #tpu.dot_dimension_numbers<[1], [0], [0], [1], [0, 0, 1, 1], [], []>} : vector<16x32xbf16>, vector<32x128xbf16>, vector<16x128xf32> -> vector<16x128xf32>
    %5 = vector.broadcast %2 : vector<1x128xf32> to vector<16x128xf32>
    %6 = arith.addf %4, %5 : vector<16x128xf32>
    %7 = math.tanh %6 : vector<16x128xf32>
    %c0_5 = arith.constant 0 : index
    %c0_6 = arith.constant 0 : index
    %8 = vector.load %arg4[%c0_5, %c0_6] : memref<128x128xbf16, #tpu.memory_space<vmem>>, vector<128x128xbf16>
    %c0_7 = arith.constant 0 : index
    %c0_8 = arith.constant 0 : index
    %9 = vector.load %arg5[%c0_7, %c0_8] : memref<1x128xf32, #tpu.memory_space<vmem>>, vector<1x128xf32>
    %10 = arith.truncf %7 : vector<16x128xf32> to vector<16x128xbf16>
    %cst_9 = arith.constant dense<0.000000e+00> : vector<16x128xf32>
    %11 = tpu.matmul %10, %8, %cst_9 {dimension_numbers = #tpu.dot_dimension_numbers<[1], [0], [0], [1], [0, 0, 1, 1], [], []>} : vector<16x128xbf16>, vector<128x128xbf16>, vector<16x128xf32> -> vector<16x128xf32>
    %12 = vector.broadcast %9 : vector<1x128xf32> to vector<16x128xf32>
    %13 = arith.addf %11, %12 : vector<16x128xf32>
    %14 = vector.extract_strided_slice %13 {offsets = [0, 0], sizes = [16, 32], strides = [1, 1]} : vector<16x128xf32> to vector<16x32xf32>
    %c0_10 = arith.constant 0 : index
    %c0_11 = arith.constant 0 : index
    %15 = vector.load %arg6[%c0_10, %c0_11] : memref<16x32xf32, #tpu.memory_space<vmem>>, vector<16x32xf32>
    tpu.vector_store %arg6[%c0_10, %c0_11], %14 {strides = array<i32>} : memref<16x32xf32, #tpu.memory_space<vmem>>, vector<16x32xf32>,
    return
  }
  func.func @transform_0(%arg0: i32) -> (i32, i32) {
    %c0_i32 = arith.constant 0 : i32
    %c0_i32_0 = arith.constant 0 : i32
    return %arg0, %c0_i32 : i32, i32
  }
  func.func @transform_1(%arg0: i32) -> (i32, i32) {
    %c0_i32 = arith.constant 0 : i32
    %c0_i32_0 = arith.constant 0 : i32
    %c0_i32_1 = arith.constant 0 : i32
    return %c0_i32, %c0_i32_0 : i32, i32
  }
  func.func @transform_2(%arg0: i32) -> (i32, i32) {
    %c0_i32 = arith.constant 0 : i32
    %c0_i32_0 = arith.constant 0 : i32
    %c0_i32_1 = arith.constant 0 : i32
    return %c0_i32, %c0_i32_0 : i32, i32
  }
  func.func @transform_3(%arg0: i32) -> (i32, i32) {
    %c0_i32 = arith.constant 0 : i32
    %c0_i32_0 = arith.constant 0 : i32
    %c0_i32_1 = arith.constant 0 : i32
    return %c0_i32, %c0_i32_0 : i32, i32
  }
  func.func @transform_4(%arg0: i32) -> (i32, i32) {
    %c0_i32 = arith.constant 0 : i32
    %c0_i32_0 = arith.constant 0 : i32
    %c0_i32_1 = arith.constant 0 : i32
    return %c0_i32, %c0_i32_0 : i32, i32
  }
  func.func @transform_5(%arg0: i32) -> (i32, i32) {
    %c0_i32 = arith.constant 0 : i32
    %c0_i32_0 = arith.constant 0 : i32
    return %arg0, %c0_i32 : i32, i32
  }
}

</mosaic_0001>

<llo_original>
// kernel: tpu_custom_call.1
$region0: #{tpu_custom_call.1}
  #allocation0 [shape = 'u32[]', space=smem, size = 0x4, offset = 0x4, fixed_abs, tag = 'smem constant byte address 0x4 - core index']
  #allocation1 [shape = 'u32[144,128]{1,0:T(1,128)}', space=vmem, size = 0x12000, scoped, tag = 'internal scratch']
  %s0 = inlined_call_operand.hbm [shape: f32[16,32], index: 0, kind: input, shape index: {}]
  %s1 = inlined_call_operand.hbm [shape: bf16[32,128], index: 1, kind: input, shape index: {}]
  %s2 = inlined_call_operand.vmem [shape: f32[1,128], index: 2, kind: input, shape index: {}]
  %s3 = inlined_call_operand.hbm [shape: bf16[128,128], index: 3, kind: input, shape index: {}]
  %s4 = inlined_call_operand.vmem [shape: f32[1,128], index: 4, kind: input, shape index: {}]
  %s5 = inlined_call_operand.hbm [shape: f32[16,32], index: 5, kind: output, shape index: {}]
  %s6 = sld [smem:[#allocation0]]
  $region42: #{tpu_custom_call.1} parent=0
    _
  %s8 = ssub.s32 1, %s6
  %s9 = scalar_select 0, %s8, %s6
  $region1: #{tpu_custom_call.1} parent=0
    #allocation2 [shape = 'u8[8192]{0}', space=vmem, size = 0x2000, scoped, tag = 'input window, operand 0, single buffered']
    #allocation3 [shape = 's32[1]{0}', space=sflag, size = 0x4, scoped, tag = 'scoped memory for tpu_custom_call.1']
    #allocation4 [shape = 's32[1]{0}', space=sflag, size = 0x4, scoped, tag = 'scoped memory for tpu_custom_call.1']
    #allocation5 [shape = 'u8[8192]{0}', space=vmem, size = 0x2000, scoped, tag = 'input window, operand 1, single buffered']
    #allocation6 [shape = 's32[1]{0}', space=sflag, size = 0x4, scoped, tag = 'scoped memory for tpu_custom_call.1']
    #allocation7 [shape = 'u8[32768]{0}', space=vmem, size = 0x8000, scoped, tag = 'input window, operand 3, single buffered']
    #allocation8 [shape = 'u8[8192]{0}', space=vmem, size = 0x2000, scoped, tag = 'output window, operand 0, single buffered']
    %10 = vsyncpa [#allocation3], 0
    %11 = vsyncpa [#allocation6], 0
    %12 = vsyncpa [#allocation4], 0
    // Predicated region
    $region2: #{tpu_custom_call.1} parent=1 // pred_check
      _
    $region3: #{tpu_custom_call.1} parent=1 // pred_check_branch
      %14 = sbr.rel (0) target = $region5
    $region4: #{tpu_custom_call.1} parent=1 // pred_region
      %s16 = ssub.s32 256, 256
      %17 = vsyncadd [#allocation3], %s16
      %s18 = sshll.u32 [#allocation2], 4
      %s19 = int_to_ptr.vmem [resolvable:$true] %s18
      %24 = dma.hbm_to_vmem [thread:$0]  %s0, 256, %s19, [#allocation3], 128, 128, 8
    $region5: #{tpu_custom_call.1} parent=1 // pred_fallthru
      _
    // Predicated region
    $region6: #{tpu_custom_call.1} parent=1 // pred_check
      _
    $region7: #{tpu_custom_call.1} parent=1 // pred_check_branch
      %26 = sbr.rel (0) target = $region9
    $region8: #{tpu_custom_call.1} parent=1 // pred_region
      %s28 = ssub.s32 256, 256
      %29 = vsyncadd [#allocation6], %s28
      %s30 = sshll.u32 [#allocation5], 4
      %s31 = int_to_ptr.vmem [resolvable:$true] %s30
      %36 = dma.hbm_to_vmem [thread:$0]  %s1, 256, %s31, [#allocation6], 64, 64, 4
    $region9: #{tpu_custom_call.1} parent=1 // pred_fallthru
      _
    // Predicated region
    $region10: #{tpu_custom_call.1} parent=1 // pred_check
      _
    $region11: #{tpu_custom_call.1} parent=1 // pred_check_branch
      %38 = sbr.rel (0) target = $region13
    $region12: #{tpu_custom_call.1} parent=1 // pred_region
      _
    $region13: #{tpu_custom_call.1} parent=1 // pred_fallthru
      _
    // Predicated region
    $region14: #{tpu_custom_call.1} parent=1 // pred_check
      _
    $region15: #{tpu_custom_call.1} parent=1 // pred_check_branch
      %40 = sbr.rel (0) target = $region17
    $region16: #{tpu_custom_call.1} parent=1 // pred_region
      %s42 = ssub.s32 1024, 1024
      %43 = vsyncadd [#allocation6], %s42
      %s44 = sshll.u32 [#allocation7], 4
      %s45 = int_to_ptr.vmem [resolvable:$true] %s44
      %50 = dma.hbm_to_vmem [thread:$0]  %s3, 1024, %s45, [#allocation6], 64, 64, 4
    $region17: #{tpu_custom_call.1} parent=1 // pred_fallthru
      _
    // Predicated region
    $region18: #{tpu_custom_call.1} parent=1 // pred_check
      _
    $region19: #{tpu_custom_call.1} parent=1 // pred_check_branch
      %52 = sbr.rel (0) target = $region21
    $region20: #{tpu_custom_call.1} parent=1 // pred_region
      _
    $region21: #{tpu_custom_call.1} parent=1 // pred_fallthru
      _
    // Predicated region
    $region22: #{tpu_custom_call.1} parent=1 // pred_check
      _
    $region23: #{tpu_custom_call.1} parent=1 // pred_check_branch
      %54 = sbr.rel (0) target = $region25
    $region24: #{tpu_custom_call.1} parent=1 // pred_region
      %55 = dma.done [#allocation3], 256
    $region25: #{tpu_custom_call.1} parent=1 // pred_fallthru
      _
    // Predicated region
    $region26: #{tpu_custom_call.1} parent=1 // pred_check
      _
    $region27: #{tpu_custom_call.1} parent=1 // pred_check_branch
      %57 = sbr.rel (0) target = $region29
    $region28: #{tpu_custom_call.1} parent=1 // pred_region
      %58 = dma.done [#allocation6], 256
    $region29: #{tpu_custom_call.1} parent=1 // pred_fallthru
      _
    // Predicated region
    $region30: #{tpu_custom_call.1} parent=1 // pred_check
      _
    $region31: #{tpu_custom_call.1} parent=1 // pred_check_branch
      %60 = sbr.rel (0) target = $region33
    $region32: #{tpu_custom_call.1} parent=1 // pred_region
      %61 = dma.done [#allocation6], 1024
    $region33: #{tpu_custom_call.1} parent=1 // pred_fallthru
      _
    %v63 = vld [vmem:[#allocation2] sm:$0xff]
    %v64 = vld [vmem:[#allocation2 + $0x8] sm:$0xff]
    %v65 = vld [vmem:[#allocation5] sm:$0xf]
    %v66 = vld [vmem:[#allocation5 + $0x4] sm:$0xf]
    %v67 = vld [vmem:[#allocation5 + $0x8] sm:$0xf]
    %v68 = vld [vmem:[#allocation5 + $0xc] sm:$0xf]
    %v69 = vld [vmem:[%s2] sm:$0x1]
    %v70 = vpack.c.bf16 %v64, %v63
    %v72 = vlaneseq
    %v73 = vshrl.u32 %v72, 7
    %v74 = vsub.s32 0, %v73
    %v75 = vrot.slane %v69, %v74
    %v81 = vunpack.c.l.b16 %v65
    %v82 = vunpack.c.l.b16 %v66
    %v83 = vunpack.c.l.b16 %v67
    %v84 = vunpack.c.l.b16 %v68
    %v85 = vpack.c.b16 %v82, %v81
    %v86 = vpack.c.b16 %v84, %v83
    %vm89 = vcmask 261120
    %v91 = vsel %vm89, %v70, 0
    %93 = vmatprep.subr.bf16.mxu0 0
    %94 = vmatpush1.bf16.msra.mxu0 0
    %95 = vmatprep.subr.bf16.mxu0 0
    %96 = vmatpush1.bf16.msra.mxu0 0
    %97 = vmatprep.subr.bf16.mxu0 0
    %98 = vmatpush1.bf16.msra.mxu0 0
    %99 = vmatprep.subr.bf16.mxu0 0
    %100 = vmatpush1.bf16.msra.mxu0 0
    %101 = vmatprep.subr.bf16.mxu0 0
    %102 = vmatpush1.bf16.msra.mxu0 0
    %103 = vmatprep.subr.bf16.mxu0 0
    %104 = vmatpush1.bf16.msra.mxu0 0
    %105 = vmatprep.subr.bf16.mxu0 0
    %106 = vmatpush1.bf16.msra.mxu0 %v86
    %107 = vmatprep.subr.bf16.mxu0 0
    %108 = vmatpush1.bf16.msra.mxu0 %v85
    %109 = vmatprep.subr.bf16.mxu0 0
    %110 = vmatpush2.bf16.msra.mxu0 0
    %111 = vmatprep.subr.bf16.mxu0 0
    %112 = vmatpush2.bf16.msra.mxu0 0
    %113 = vmatprep.subr.bf16.mxu0 0
    %114 = vmatpush2.bf16.msra.mxu0 0
    %115 = vmatprep.subr.bf16.mxu0 0
    %116 = vmatpush2.bf16.msra.mxu0 0
    %117 = vmatprep.subr.bf16.mxu0 0
    %118 = vmatpush2.bf16.msra.mxu0 0
    %119 = vmatprep.subr.bf16.mxu0 0
    %120 = vmatpush2.bf16.msra.mxu0 0
    %121 = vmatprep.subr.bf16.mxu0 0
    %122 = vmatpush2.bf16.msra.mxu0 0
    %123 = vmatprep.subr.bf16.mxu0 0
    %124 = vmatpush2.bf16.msra.mxu0 0
    %125 = vmatprep.mubr.bf16.mxu0 0
    %126 = vmatmul.mubr.bf16.gmra.mxu0 %v91
    %v127 = vpop.f32.mrf.mxu0
    %v128 = vadd.f32 %v75, %v127
    %v129 = vpop.f32.mrf.mxu0
    %v130 = vpop.f32.mrf.mxu0
    %v131 = vadd.f32 %v75, %v130
    %v132 = vpop.f32.mrf.mxu0
    %133 = vdwg.mxu0
    %v134 = vtanh.pop %v128
    %v135 = vtanh.pop %v131
    %v136 = vld [vmem:[#allocation7] sm:$0xf]
    %v137 = vld [vmem:[#allocation7 + $0x4] sm:$0xf]
    %v138 = vld [vmem:[#allocation7 + $0x8] sm:$0xf]
    %v139 = vld [vmem:[#allocation7 + $0xc] sm:$0xf]
    %v140 = vld [vmem:[#allocation7 + $0x10] sm:$0xf]
    %v141 = vld [vmem:[#allocation7 + $0x14] sm:$0xf]
    %v142 = vld [vmem:[#allocation7 + $0x18] sm:$0xf]
    %v143 = vld [vmem:[#allocation7 + $0x1c] sm:$0xf]
    %v144 = vld [vmem:[#allocation7 + $0x20] sm:$0xf]
    %v145 = vld [vmem:[#allocation7 + $0x24] sm:$0xf]
    %v146 = vld [vmem:[#allocation7 + $0x28] sm:$0xf]
    %v147 = vld [vmem:[#allocation7 + $0x2c] sm:$0xf]
    %v148 = vld [vmem:[#allocation7 + $0x30] sm:$0xf]
    %v149 = vld [vmem:[#allocation7 + $0x34] sm:$0xf]
    %v150 = vld [vmem:[#allocation7 + $0x38] sm:$0xf]
    %v151 = vld [vmem:[#allocation7 + $0x3c] sm:$0xf]
    %v152 = vld [vmem:[%s4] sm:$0x1]
    %v153 = vpack.c.bf16 %v135, %v134
    %v155 = vlaneseq
    %v156 = vshrl.u32 %v155, 7
    %v157 = vsub.s32 0, %v156
    %v158 = vrot.slane %v152, %v157
    %v176 = vunpack.c.l.b16 %v136
    %v177 = vunpack.c.l.b16 %v137
    %v178 = vunpack.c.l.b16 %v138
    %v179 = vunpack.c.l.b16 %v139
    %v180 = vunpack.c.l.b16 %v140
    %v181 = vunpack.c.l.b16 %v141
    %v182 = vunpack.c.l.b16 %v142
    %v183 = vunpack.c.l.b16 %v143
    %v184 = vunpack.c.l.b16 %v144
    %v185 = vunpack.c.l.b16 %v145
    %v186 = vunpack.c.l.b16 %v146
    %v187 = vunpack.c.l.b16 %v147
    %v188 = vunpack.c.l.b16 %v148
    %v189 = vunpack.c.l.b16 %v149
    %v190 = vunpack.c.l.b16 %v150
    %v191 = vunpack.c.l.b16 %v151
    %v192 = vpack.c.b16 %v177, %v176
    %v193 = vpack.c.b16 %v179, %v178
    %v194 = vpack.c.b16 %v181, %v180
    %v195 = vpack.c.b16 %v183, %v182
    %v196 = vpack.c.b16 %v185, %v184
    %v197 = vpack.c.b16 %v187, %v186
    %v198 = vpack.c.b16 %v189, %v188
    %v199 = vpack.c.b16 %v191, %v190
    %208 = vmatprep.subr.bf16.mxu0 0
    %209 = vmatpush1.bf16.msra.mxu0 %v199
    %210 = vmatprep.subr.bf16.mxu0 0
    %211 = vmatpush1.bf16.msra.mxu0 %v198
    %212 = vmatprep.subr.bf16.mxu0 0
    %213 = vmatpush1.bf16.msra.mxu0 %v197
    %214 = vmatprep.subr.bf16.mxu0 0
    %215 = vmatpush1.bf16.msra.mxu0 %v196
    %216 = vmatprep.subr.bf16.mxu0 0
    %217 = vmatpush1.bf16.msra.mxu0 %v195
    %218 = vmatprep.subr.bf16.mxu0 0
    %219 = vmatpush1.bf16.msra.mxu0 %v194
    %220 = vmatprep.subr.bf16.mxu0 0
    %221 = vmatpush1.bf16.msra.mxu0 %v193
    %222 = vmatprep.subr.bf16.mxu0 0
    %223 = vmatpush1.bf16.msra.mxu0 %v192
    %224 = vmatprep.subr.bf16.mxu0 0
    %225 = vmatpush2.bf16.msra.mxu0 0
    %226 = vmatprep.subr.bf16.mxu0 0
    %227 = vmatpush2.bf16.msra.mxu0 0
    %228 = vmatprep.subr.bf16.mxu0 0
    %229 = vmatpush2.bf16.msra.mxu0 0
    %230 = vmatprep.subr.bf16.mxu0 0
    %231 = vmatpush2.bf16.msra.mxu0 0
    %232 = vmatprep.subr.bf16.mxu0 0
    %233 = vmatpush2.bf16.msra.mxu0 0
    %234 = vmatprep.subr.bf16.mxu0 0
    %235 = vmatpush2.bf16.msra.mxu0 0
    %236 = vmatprep.subr.bf16.mxu0 0
    %237 = vmatpush2.bf16.msra.mxu0 0
    %238 = vmatprep.subr.bf16.mxu0 0
    %239 = vmatpush2.bf16.msra.mxu0 0
    %240 = vmatprep.mubr.bf16.mxu0 0
    %241 = vmatmul.mubr.bf16.gmra.mxu0 %v153
    %v242 = vpop.f32.mrf.mxu0
    %v243 = vadd.f32 %v158, %v242
    %v244 = vpop.f32.mrf.mxu0
    %v245 = vpop.f32.mrf.mxu0
    %v246 = vadd.f32 %v158, %v245
    %v247 = vpop.f32.mrf.mxu0
    %248 = vdwg.mxu0
    %249 = vst.msk [vmem:[#allocation8] sm:$0xff] %vm89, %v243
    %250 = vst.msk [vmem:[#allocation8 + $0x8] sm:$0xff] %vm89, %v246
    // Predicated region
    $region34: #{tpu_custom_call.1} parent=1 // pred_check
      _
    $region35: #{tpu_custom_call.1} parent=1 // pred_check_branch
      %252 = sbr.rel (0) target = $region37
    $region36: #{tpu_custom_call.1} parent=1 // pred_region
      %s254 = ssub.s32 256, 256
      %255 = vsyncadd [#allocation4], %s254
      %s256 = sshll.u32 [#allocation8], 4
      %s257 = int_to_ptr.vmem [resolvable:$true] %s256
      %262 = dma.vmem_to_hbm [thread:$0]  %s257, 256, %s5, [#allocation4], 128, 128, 8
    $region37: #{tpu_custom_call.1} parent=1 // pred_fallthru
      _
    // Predicated region
    $region38: #{tpu_custom_call.1} parent=1 // pred_check
      _
    $region39: #{tpu_custom_call.1} parent=1 // pred_check_branch
      %264 = sbr.rel (0) target = $region41
    $region40: #{tpu_custom_call.1} parent=1 // pred_region
      %265 = dma.done [#allocation4], 256
    $region41: #{tpu_custom_call.1} parent=1 // pred_fallthru
      _
    %266 = vsyncpa [#allocation3], 1
    %267 = vsyncpa [#allocation6], 1
    %268 = vsyncpa [#allocation4], 1

</llo_original>
